<compile_context>
chip_gen: v5e
topology: v5e:2x2
jax: 0.10.0
libtpu: 0.0.40
codegen_flags: <defaults>
</compile_context>

<pallas_src>
import jax
import jax.numpy as jnp
from jax.experimental import pallas as pl
from jax.experimental.pallas import tpu as pltpu


LEAKY_SLOPE = 0.01   # nn.LeakyReLU() default negative_slope
PACK = 4             # samples packed per 128-lane row (4 * 32 lanes = 128)


def _leaky_relu(x):
    return jnp.where(x > 0, x, LEAKY_SLOPE * x)


def grasp_encoder_kernel(x_ref, w1_ref, b1_ref, w2_ref, b2_ref, o_ref):
    """One batch-tile of the lane-packed part_encoder MLP.

    x_ref:  (bt, 2*PACK)      packed grasp rows (4 samples / row)
    w1_ref: (2*PACK, PACK*H)  block-diagonal W1
    b1_ref: (1, PACK*H)       lane-tiled b1
    w2_ref: (PACK*H, PACK*P)  block-diagonal W2 (f32 or bf16)
    b2_ref: (1, PACK*P)       lane-tiled b2
    o_ref:  (bt, PACK*P)      lane-dense packed output
    """
    x = x_ref[...].astype(jnp.float32)                              # (bt, 8)

    # Layer 1: K=8 packed matmul; block-diagonal W1 keeps each sample in its
    # own H-lane group. Bias already tiled along lanes.
    h = jnp.dot(x, w1_ref[...], preferred_element_type=jnp.float32)
    h = _leaky_relu(h + b1_ref[...])                                # (bt, 4H)

    # Layer 2: (bt, 4H) @ (4H, 4P) on the MXU with f32 accumulation.
    # If w2 was passed as bf16 this becomes a bf16-input / f32-acc matmul.
    y = jnp.dot(h.astype(w2_ref.dtype), w2_ref[...],
                preferred_element_type=jnp.float32)
    y = _leaky_relu(y + b2_ref[...])                                # (bt, 4P)
    o_ref[...] = y.astype(o_ref.dtype)


def grasp_encoder_forward(grasp, params, *, batch_tile_rows=None,
                          use_bf16=False):
    """grasp: (B, 2) -> (B, part_encoder_dim), matching GraspEncoder.forward."""
    B, two = grasp.shape
    assert two == 2
    w1, b1, w2, b2 = params["w1"], params["b1"], params["w2"], params["b2"]
    H = w1.shape[1]
    P = w2.shape[1]
    out_dtype = grasp.dtype

    # --- pack PACK samples per lane-row (free, row-major reshape) -----------
    pad = (-B) % PACK
    if pad:
        # TODO(synk): handle the <PACK-sample ragged tail in-kernel (masked
        # store) instead of this wrapper pad/slice; only hit when B % 4 != 0.
        grasp = jnp.pad(grasp, ((0, pad), (0, 0)))
    R = (B + pad) // PACK
    x_packed = grasp.reshape(R, PACK * 2)

    # Block-diagonal replication: off-diagonal blocks are exactly zero, so
    # samples sharing a lane row cannot cross-contaminate.
    w1_blk = jnp.kron(jnp.eye(PACK, dtype=w1.dtype), w1)   # (2*PACK, PACK*H)
    w2_blk = jnp.kron(jnp.eye(PACK, dtype=w2.dtype), w2)   # (PACK*H, PACK*P)
    b1_t = jnp.tile(b1, (1, PACK))                         # (1, PACK*H)
    b2_t = jnp.tile(b2, (1, PACK))                         # (1, PACK*P)
    if use_bf16:
        w2_blk = w2_blk.astype(jnp.bfloat16)               # MXU-native layer 2

    HL = PACK * H
    PL = PACK * P

    # --- tile selection (in packed rows) -------------------------------------
    if batch_tile_rows is None:
        if R <= 1024:                      # <= 4096 samples: one grid step
            batch_tile_rows = R
        else:
            # Big tiles amortize the ~0.35us/step fixed cost; >=2 steps so the
            # batch axis can shard across v7x's two TensorCores. Per-step VMEM
            # at 4096 rows is ~10 MiB (well under the 32 MiB scoped limit).
            batch_tile_rows = min(4096, pl.cdiv(R, 2))
    batch_tile_rows = min(batch_tile_rows, R)
    if batch_tile_rows < R:
        # multi-step tiles must be sublane (8) aligned
        batch_tile_rows = max(8, (batch_tile_rows // 8) * 8)

    n_steps = pl.cdiv(R, batch_tile_rows)   # ragged tail handled by Pallas
                                            # boundary masking (no wrapper pad)

    out_packed = pl.pallas_call(
        grasp_encoder_kernel,
        out_shape=jax.ShapeDtypeStruct((R, PL), out_dtype),
        grid=(n_steps,),
        in_specs=[
            pl.BlockSpec((batch_tile_rows, PACK * 2), lambda i: (i, 0)),  # x
            pl.BlockSpec((PACK * 2, HL), lambda i: (0, 0)),   # W1 (resident)
            pl.BlockSpec((1, HL), lambda i: (0, 0)),          # b1 (resident)
            pl.BlockSpec((HL, PL), lambda i: (0, 0)),         # W2 (resident)
            pl.BlockSpec((1, PL), lambda i: (0, 0)),          # b2 (resident)
        ],
        out_specs=pl.BlockSpec((batch_tile_rows, PL), lambda i: (i, 0)),
        compiler_params=pltpu.CompilerParams(
            dimension_semantics=("parallel",),
            vmem_limit_bytes=32 * 1024 * 1024,
        ),
    )(x_packed, w1_blk, b1_t, w2_blk, b2_t)

    # Unpack: (R, PACK*P) -> (R*PACK, P) is a free row-major reshape.
    out = out_packed.reshape(R * PACK, P)
    if pad:
        out = out[:B]
    # .view(batch_size, -1) in PyTorch: output is already (B, P).
    return out


def init_params(key, part_encoder_dim=32, grasp_encoder_dim=16, hidden=32):
    """Deterministic synthetic parameters (shapes implied by the module)."""
    k1, k2, k3, k4, k5, k6 = jax.random.split(key, 6)
    params = {
        # part_encoder (per-point shared MLP): 2 -> hidden -> part_encoder_dim
        "w1": jax.random.normal(k1, (2, hidden), jnp.float32) * 0.1,
        "b1": jax.random.normal(k2, (1, hidden), jnp.float32) * 0.1,
        "w2": jax.random.normal(k3, (hidden, part_encoder_dim), jnp.float32) * 0.1,
        "b2": jax.random.normal(k4, (1, part_encoder_dim), jnp.float32) * 0.1,
        # grasp_propagation: Linear(part_encoder_dim, grasp_encoder_dim)
        # (defined in __init__ but unused in forward — kept for completeness)
        "wp": jax.random.normal(k5, (part_encoder_dim, grasp_encoder_dim),
                                jnp.float32) * 0.1,
        "bp": jax.random.normal(k6, (1, grasp_encoder_dim), jnp.float32) * 0.1,
    }
    return params


def reference_forward(grasp, params):
    """Pure-JAX reference of the same forward semantics (use for B <~ 128)."""
    h = _leaky_relu(grasp @ params["w1"] + params["b1"])
    y = _leaky_relu(h @ params["w2"] + params["b2"])
    return y


if __name__ == "__main__":
    key = jax.random.PRNGKey(0)
    kx, kp = jax.random.split(key)

    B = 16                       # batch
    PART_DIM = 32                # part_encoder_dim
    GRASP_DIM = 16               # grasp_encoder_dim (unused in forward)
    HIDDEN = 32

    grasp = jax.random.normal(kx, (B, 2), jnp.float32)   # (B, 2) grasp points
    params = init_params(kp, part_encoder_dim=PART_DIM,
                         grasp_encoder_dim=GRASP_DIM, hidden=HIDDEN)

    # 1) Small-B path: single grid step, f32, lane-packed output.
    out = jax.block_until_ready(grasp_encoder_forward(grasp, params))
    ref = reference_forward(grasp, params)
    assert out.shape == (B, PART_DIM), out.shape
    assert jnp.allclose(out, ref, atol=1e-5, rtol=1e-5), "mismatch vs reference"

    # 2) bf16 layer-2 matmul (f32 accumulate): looser tolerance expected.
    out_bf = jax.block_until_ready(
        grasp_encoder_forward(grasp, params, use_bf16=True))
    assert jnp.allclose(out_bf, ref, atol=5e-3, rtol=2e-2), "bf16 path mismatch"

    # 3) Multi-step path with a ragged final tile (no wrapper pad/slice):
    #    B=80 -> 20 packed rows, tile of 8 rows -> grid of 3 with masked tail.
    grasp2 = jax.random.normal(jax.random.PRNGKey(1), (80, 2), jnp.float32)
    out2 = jax.block_until_ready(
        grasp_encoder_forward(grasp2, params, batch_tile_rows=8))
    ref2 = reference_forward(grasp2, params)
    assert out2.shape == (80, PART_DIM), out2.shape
    assert jnp.allclose(out2, ref2, atol=1e-5, rtol=1e-5), "ragged-path mismatch"

    # 4) B not a multiple of 4: minimal pad/slice fallback path.
    grasp3 = jax.random.normal(jax.random.PRNGKey(2), (10, 2), jnp.float32)
    out3 = jax.block_until_ready(grasp_encoder_forward(grasp3, params))
    ref3 = reference_forward(grasp3, params)
    assert out3.shape == (10, PART_DIM), out3.shape
    assert jnp.allclose(out3, ref3, atol=1e-5, rtol=1e-5), "pad-path mismatch"

    print("KERNEL_OK")
</pallas_src>

<mosaic_0001>
module attributes {stable_mosaic.version = 11 : i64} {
  func.func @grasp_encoder_kernel(%arg0: i32, %arg1: memref<4x8xf32, #tpu.memory_space<vmem>>, %arg2: memref<8x128xf32, #tpu.memory_space<vmem>>, %arg3: memref<1x128xf32, #tpu.memory_space<vmem>>, %arg4: memref<128x128xf32, #tpu.memory_space<vmem>>, %arg5: memref<1x128xf32, #tpu.memory_space<vmem>>, %arg6: memref<4x128xf32, #tpu.memory_space<vmem>>) attributes {dimension_semantics = [#tpu.dimension_semantics<parallel>], iteration_bounds = array<i64: 1>, scalar_prefetch = 0 : i64, scratch_operands = 0 : i64, tpu.core_type = #tpu.core_type<tc>, window_params = [{transform_indices = @transform_0, window_bounds = array<i64: 4, 8>}, {pipeline_mode = #tpu.pipeline_mode<synchronous>, transform_indices = @transform_1, window_bounds = array<i64: 8, 128>}, {pipeline_mode = #tpu.pipeline_mode<synchronous>, transform_indices = @transform_2, window_bounds = array<i64: 1, 128>}, {pipeline_mode = #tpu.pipeline_mode<synchronous>, transform_indices = @transform_3, window_bounds = array<i64: 128, 128>}, {pipeline_mode = #tpu.pipeline_mode<synchronous>, transform_indices = @transform_4, window_bounds = array<i64: 1, 128>}, {transform_indices = @transform_5, window_bounds = array<i64: 4, 128>}]} {
    %c0 = arith.constant 0 : index
    %c0_0 = arith.constant 0 : index
    %0 = vector.load %arg1[%c0, %c0_0] : memref<4x8xf32, #tpu.memory_space<vmem>>, vector<4x8xf32>
    %c0_1 = arith.constant 0 : index
    %c0_2 = arith.constant 0 : index
    %1 = vector.load %arg2[%c0_1, %c0_2] : memref<8x128xf32, #tpu.memory_space<vmem>>, vector<8x128xf32>
    %cst = arith.constant dense<0.000000e+00> : vector<4x128xf32>
    %2 = tpu.matmul %0, %1, %cst {dimension_numbers = #tpu.dot_dimension_numbers<[1], [0], [0], [1], [0, 0, 1, 1], [], []>} : vector<4x8xf32>, vector<8x128xf32>, vector<4x128xf32> -> vector<4x128xf32>
    %c0_3 = arith.constant 0 : index
    %c0_4 = arith.constant 0 : index
    %3 = vector.load %arg3[%c0_3, %c0_4] : memref<1x128xf32, #tpu.memory_space<vmem>>, vector<1x128xf32>
    %4 = vector.broadcast %3 : vector<1x128xf32> to vector<4x128xf32>
    %5 = arith.addf %2, %4 : vector<4x128xf32>
    %cst_5 = arith.constant 0.000000e+00 : f32
    %6 = vector.broadcast %cst_5 : f32 to vector<4x128xf32>
    %7 = arith.cmpf ogt, %5, %6 : vector<4x128xf32>
    %cst_6 = arith.constant 0.00999999977 : f32
    %8 = vector.broadcast %cst_6 : f32 to vector<4x128xf32>
    %9 = arith.mulf %8, %5 : vector<4x128xf32>
    %10 = arith.select %7, %5, %9 : vector<4x128xi1>, vector<4x128xf32>
    %c0_7 = arith.constant 0 : index
    %c0_8 = arith.constant 0 : index
    %11 = vector.load %arg4[%c0_7, %c0_8] : memref<128x128xf32, #tpu.memory_space<vmem>>, vector<128x128xf32>
    %cst_9 = arith.constant dense<0.000000e+00> : vector<4x128xf32>
    %12 = tpu.matmul %10, %11, %cst_9 {dimension_numbers = #tpu.dot_dimension_numbers<[1], [0], [0], [1], [0, 0, 1, 1], [], []>} : vector<4x128xf32>, vector<128x128xf32>, vector<4x128xf32> -> vector<4x128xf32>
    %c0_10 = arith.constant 0 : index
    %c0_11 = arith.constant 0 : index
    %13 = vector.load %arg5[%c0_10, %c0_11] : memref<1x128xf32, #tpu.memory_space<vmem>>, vector<1x128xf32>
    %14 = vector.broadcast %13 : vector<1x128xf32> to vector<4x128xf32>
    %15 = arith.addf %12, %14 : vector<4x128xf32>
    %cst_12 = arith.constant 0.000000e+00 : f32
    %16 = vector.broadcast %cst_12 : f32 to vector<4x128xf32>
    %17 = arith.cmpf ogt, %15, %16 : vector<4x128xf32>
    %cst_13 = arith.constant 0.00999999977 : f32
    %18 = vector.broadcast %cst_13 : f32 to vector<4x128xf32>
    %19 = arith.mulf %18, %15 : vector<4x128xf32>
    %20 = arith.select %17, %15, %19 : vector<4x128xi1>, vector<4x128xf32>
    %c0_14 = arith.constant 0 : index
    %c0_15 = arith.constant 0 : index
    %21 = vector.load %arg6[%c0_14, %c0_15] : memref<4x128xf32, #tpu.memory_space<vmem>>, vector<4x128xf32>
    tpu.vector_store %arg6[%c0_14, %c0_15], %20 {strides = array<i32>} : memref<4x128xf32, #tpu.memory_space<vmem>>, vector<4x128xf32>,
    return
  }
  func.func @transform_0(%arg0: i32) -> (i32, i32) {
    %c0_i32 = arith.constant 0 : i32
    %c0_i32_0 = arith.constant 0 : i32
    return %arg0, %c0_i32 : i32, i32
  }
  func.func @transform_1(%arg0: i32) -> (i32, i32) {
    %c0_i32 = arith.constant 0 : i32
    %c0_i32_0 = arith.constant 0 : i32
    %c0_i32_1 = arith.constant 0 : i32
    return %c0_i32, %c0_i32_0 : i32, i32
  }
  func.func @transform_2(%arg0: i32) -> (i32, i32) {
    %c0_i32 = arith.constant 0 : i32
    %c0_i32_0 = arith.constant 0 : i32
    %c0_i32_1 = arith.constant 0 : i32
    return %c0_i32, %c0_i32_0 : i32, i32
  }
  func.func @transform_3(%arg0: i32) -> (i32, i32) {
    %c0_i32 = arith.constant 0 : i32
    %c0_i32_0 = arith.constant 0 : i32
    %c0_i32_1 = arith.constant 0 : i32
    return %c0_i32, %c0_i32_0 : i32, i32
  }
  func.func @transform_4(%arg0: i32) -> (i32, i32) {
    %c0_i32 = arith.constant 0 : i32
    %c0_i32_0 = arith.constant 0 : i32
    %c0_i32_1 = arith.constant 0 : i32
    return %c0_i32, %c0_i32_0 : i32, i32
  }
  func.func @transform_5(%arg0: i32) -> (i32, i32) {
    %c0_i32 = arith.constant 0 : i32
    %c0_i32_0 = arith.constant 0 : i32
    return %arg0, %c0_i32 : i32, i32
  }
}

</mosaic_0001>

<llo_original>
// kernel: tpu_custom_call.1
$region0: #{tpu_custom_call.1}
  #allocation0 [shape = 'u32[]', space=smem, size = 0x4, offset = 0x4, fixed_abs, tag = 'smem constant byte address 0x4 - core index']
  #allocation1 [shape = 'u32[72,128]{1,0:T(1,128)}', space=vmem, size = 0x9000, scoped, tag = 'internal scratch']
  %s0 = inlined_call_operand.hbm [shape: f32[4,8], index: 0, kind: input, shape index: {}]
  %s1 = inlined_call_operand.hbm [shape: f32[8,128], index: 1, kind: input, shape index: {}]
  %s2 = inlined_call_operand.vmem [shape: f32[1,128], index: 2, kind: input, shape index: {}]
  %s3 = inlined_call_operand.hbm [shape: f32[128,128], index: 3, kind: input, shape index: {}]
  %s4 = inlined_call_operand.vmem [shape: f32[1,128], index: 4, kind: input, shape index: {}]
  %s5 = inlined_call_operand.hbm [shape: f32[4,128], index: 5, kind: output, shape index: {}]
  %s6 = sld [smem:[#allocation0]]
  $region42: #{tpu_custom_call.1} parent=0
    _
  %s8 = ssub.s32 1, %s6
  %s9 = scalar_select 0, %s8, %s6
  $region1: #{tpu_custom_call.1} parent=0
    #allocation2 [shape = 'u8[2048]{0}', space=vmem, size = 0x800, scoped, tag = 'input window, operand 0, single buffered']
    #allocation3 [shape = 's32[1]{0}', space=sflag, size = 0x4, scoped, tag = 'scoped memory for tpu_custom_call.1']
    #allocation4 [shape = 's32[1]{0}', space=sflag, size = 0x4, scoped, tag = 'scoped memory for tpu_custom_call.1']
    #allocation5 [shape = 'u8[4096]{0}', space=vmem, size = 0x1000, scoped, tag = 'input window, operand 1, single buffered']
    #allocation6 [shape = 's32[1]{0}', space=sflag, size = 0x4, scoped, tag = 'scoped memory for tpu_custom_call.1']
    #allocation7 [shape = 'u8[65536]{0}', space=vmem, size = 0x10000, scoped, tag = 'input window, operand 3, single buffered']
    #allocation8 [shape = 'u8[2048]{0}', space=vmem, size = 0x800, scoped, tag = 'output window, operand 0, single buffered']
    %10 = vsyncpa [#allocation3], 0
    %11 = vsyncpa [#allocation6], 0
    %12 = vsyncpa [#allocation4], 0
    // Predicated region
    $region2: #{tpu_custom_call.1} parent=1 // pred_check
      _
    $region3: #{tpu_custom_call.1} parent=1 // pred_check_branch
      %14 = sbr.rel (0) target = $region5
    $region4: #{tpu_custom_call.1} parent=1 // pred_region
      %16 = vsyncadd [#allocation3], 0
      %s18 = sshll.u32 %s0, 4
      %s19 = int_to_ptr.hbm [resolvable:$true] %s18
      %s20 = sshll.u32 [#allocation2], 4
      %s21 = int_to_ptr.vmem [resolvable:$true] %s20
      %23 = dma.hbm_to_vmem [thread:$0]  %s19, 64, %s21, [#allocation3]
    $region5: #{tpu_custom_call.1} parent=1 // pred_fallthru
      _
    // Predicated region
    $region6: #{tpu_custom_call.1} parent=1 // pred_check
      _
    $region7: #{tpu_custom_call.1} parent=1 // pred_check_branch
      %25 = sbr.rel (0) target = $region9
    $region8: #{tpu_custom_call.1} parent=1 // pred_region
      %27 = vsyncadd [#allocation6], 0
      %s29 = sshll.u32 %s1, 4
      %s30 = int_to_ptr.hbm [resolvable:$true] %s29
      %s31 = sshll.u32 [#allocation5], 4
      %s32 = int_to_ptr.vmem [resolvable:$true] %s31
      %34 = dma.hbm_to_vmem [thread:$0]  %s30, 128, %s32, [#allocation6]
    $region9: #{tpu_custom_call.1} parent=1 // pred_fallthru
      _
    // Predicated region
    $region10: #{tpu_custom_call.1} parent=1 // pred_check
      _
    $region11: #{tpu_custom_call.1} parent=1 // pred_check_branch
      %36 = sbr.rel (0) target = $region13
    $region12: #{tpu_custom_call.1} parent=1 // pred_region
      _
    $region13: #{tpu_custom_call.1} parent=1 // pred_fallthru
      _
    // Predicated region
    $region14: #{tpu_custom_call.1} parent=1 // pred_check
      _
    $region15: #{tpu_custom_call.1} parent=1 // pred_check_branch
      %38 = sbr.rel (0) target = $region17
    $region16: #{tpu_custom_call.1} parent=1 // pred_region
      %40 = vsyncadd [#allocation6], 0
      %s41 = sshll.u32 %s3, 4
      %s42 = int_to_ptr.hbm [resolvable:$true] %s41
      %s43 = sshll.u32 [#allocation7], 4
      %s44 = int_to_ptr.vmem [resolvable:$true] %s43
      %49 = dma.hbm_to_vmem [thread:$0]  %s42, 2048, %s44, [#allocation6], 128, 128, 8
    $region17: #{tpu_custom_call.1} parent=1 // pred_fallthru
      _
    // Predicated region
    $region18: #{tpu_custom_call.1} parent=1 // pred_check
      _
    $region19: #{tpu_custom_call.1} parent=1 // pred_check_branch
      %51 = sbr.rel (0) target = $region21
    $region20: #{tpu_custom_call.1} parent=1 // pred_region
      _
    $region21: #{tpu_custom_call.1} parent=1 // pred_fallthru
      _
    // Predicated region
    $region22: #{tpu_custom_call.1} parent=1 // pred_check
      _
    $region23: #{tpu_custom_call.1} parent=1 // pred_check_branch
      %53 = sbr.rel (0) target = $region25
    $region24: #{tpu_custom_call.1} parent=1 // pred_region
      %55 = dma.done [#allocation3], 64
    $region25: #{tpu_custom_call.1} parent=1 // pred_fallthru
      _
    // Predicated region
    $region26: #{tpu_custom_call.1} parent=1 // pred_check
      _
    $region27: #{tpu_custom_call.1} parent=1 // pred_check_branch
      %57 = sbr.rel (0) target = $region29
    $region28: #{tpu_custom_call.1} parent=1 // pred_region
      %59 = dma.done [#allocation6], 128
    $region29: #{tpu_custom_call.1} parent=1 // pred_fallthru
      _
    // Predicated region
    $region30: #{tpu_custom_call.1} parent=1 // pred_check
      _
    $region31: #{tpu_custom_call.1} parent=1 // pred_check_branch
      %61 = sbr.rel (0) target = $region33
    $region32: #{tpu_custom_call.1} parent=1 // pred_region
      %63 = dma.done [#allocation6], 2048
    $region33: #{tpu_custom_call.1} parent=1 // pred_fallthru
      _
    %v64 = vld [vmem:[#allocation2] sm:$0xf]
    %v65 = vld [vmem:[#allocation5] sm:$0xff]
    %v66 = vld [vmem:[%s2] sm:$0x1]
    %v68 = vperm.slane %v66, 0
    %vm70 = vcmask 64512
    %v72 = vsel %vm70, %v64, 0
    %74 = vmatpush.msra.mxu0 0.0
    %75 = vmatpush.msra.mxu0 0.0
    %76 = vmatpush.msra.mxu0 0.0
    %77 = vmatpush.msra.mxu0 0.0
    %78 = vmatpush.msra.mxu0 0.0
    %79 = vmatpush.msra.mxu0 0.0
    %80 = vmatpush.msra.mxu0 0.0
    %81 = vmatpush.msra.mxu0 0.0
    %82 = vmatpush.msra.mxu0 0.0
    %83 = vmatpush.msra.mxu0 0.0
    %84 = vmatpush.msra.mxu0 0.0
    %85 = vmatpush.msra.mxu0 0.0
    %86 = vmatpush.msra.mxu0 0.0
    %87 = vmatpush.msra.mxu0 0.0
    %88 = vmatpush.msra.mxu0 0.0
    %89 = vmatpush.msra.mxu0 %v65
    %90 = vmatmul.f32.gmra.mxu0 %v72
    %v91 = vpop.f32.mrf.mxu0
    %v92 = vadd.f32 %v68, %v91
    %93 = vdwg.mxu0
    %vm94 = vcmp.gt.f32.partialorder %v92, 0.0
    %v95 = vmul.f32 %v92, 0.01
    %v96 = vsel %vm94, %v92, %v95
    %v97 = vld [vmem:[#allocation7] sm:$0xff]
    %v98 = vld [vmem:[#allocation7 + $0x8] sm:$0xff]
    %v99 = vld [vmem:[#allocation7 + $0x10] sm:$0xff]
    %v100 = vld [vmem:[#allocation7 + $0x18] sm:$0xff]
    %v101 = vld [vmem:[#allocation7 + $0x20] sm:$0xff]
    %v102 = vld [vmem:[#allocation7 + $0x28] sm:$0xff]
    %v103 = vld [vmem:[#allocation7 + $0x30] sm:$0xff]
    %v104 = vld [vmem:[#allocation7 + $0x38] sm:$0xff]
    %v105 = vld [vmem:[#allocation7 + $0x40] sm:$0xff]
    %v106 = vld [vmem:[#allocation7 + $0x48] sm:$0xff]
    %v107 = vld [vmem:[#allocation7 + $0x50] sm:$0xff]
    %v108 = vld [vmem:[#allocation7 + $0x58] sm:$0xff]
    %v109 = vld [vmem:[#allocation7 + $0x60] sm:$0xff]
    %v110 = vld [vmem:[#allocation7 + $0x68] sm:$0xff]
    %v111 = vld [vmem:[#allocation7 + $0x70] sm:$0xff]
    %v112 = vld [vmem:[#allocation7 + $0x78] sm:$0xff]
    %v113 = vld [vmem:[%s4] sm:$0x1]
    %v115 = vperm.slane %v113, 0
    %117 = vmatpush.msra.mxu0 %v112
    %118 = vmatpush.msra.mxu0 %v111
    %119 = vmatpush.msra.mxu0 %v110
    %120 = vmatpush.msra.mxu0 %v109
    %121 = vmatpush.msra.mxu0 %v108
    %122 = vmatpush.msra.mxu0 %v107
    %123 = vmatpush.msra.mxu0 %v106
    %124 = vmatpush.msra.mxu0 %v105
    %125 = vmatpush.msra.mxu0 %v104
    %126 = vmatpush.msra.mxu0 %v103
    %127 = vmatpush.msra.mxu0 %v102
    %128 = vmatpush.msra.mxu0 %v101
    %129 = vmatpush.msra.mxu0 %v100
    %130 = vmatpush.msra.mxu0 %v99
    %131 = vmatpush.msra.mxu0 %v98
    %132 = vmatpush.msra.mxu0 %v97
    %133 = vmatmul.f32.gmra.mxu0 %v96
    %v134 = vpop.f32.mrf.mxu0
    %v135 = vadd.f32 %v115, %v134
    %136 = vdwg.mxu0
    %vm137 = vcmp.gt.f32.partialorder %v135, 0.0
    %v138 = vmul.f32 %v135, 0.01
    %v139 = vsel %vm137, %v135, %v138
    %140 = vst [vmem:[#allocation8] sm:$0xf] %v139
    // Predicated region
    $region34: #{tpu_custom_call.1} parent=1 // pred_check
      _
    $region35: #{tpu_custom_call.1} parent=1 // pred_check_branch
      %142 = sbr.rel (0) target = $region37
    $region36: #{tpu_custom_call.1} parent=1 // pred_region
      %144 = vsyncadd [#allocation4], 0
      %s146 = sshll.u32 [#allocation8], 4
      %s147 = int_to_ptr.vmem [resolvable:$true] %s146
      %s148 = sshll.u32 %s5, 4
      %s149 = int_to_ptr.hbm [resolvable:$true] %s148
      %151 = dma.vmem_to_hbm [thread:$0]  %s147, 64, %s149, [#allocation4]
    $region37: #{tpu_custom_call.1} parent=1 // pred_fallthru
      _
    // Predicated region
    $region38: #{tpu_custom_call.1} parent=1 // pred_check
      _
    $region39: #{tpu_custom_call.1} parent=1 // pred_check_branch
      %153 = sbr.rel (0) target = $region41
    $region40: #{tpu_custom_call.1} parent=1 // pred_region
      %155 = dma.done [#allocation4], 64
    $region41: #{tpu_custom_call.1} parent=1 // pred_fallthru
      _
    %156 = vsyncpa [#allocation3], 1
    %157 = vsyncpa [#allocation6], 1
    %158 = vsyncpa [#allocation4], 1

</llo_original>
